<compile_context>
chip_gen: v7x
topology: tpu7x:2x2x1
jax: 0.10.0
libtpu: 0.0.40
codegen_flags: <defaults>
</compile_context>

<pallas_src>
import jax
import jax.numpy as jnp
from jax.experimental import pallas as pl
from jax.experimental.pallas import tpu as pltpu


# ----------------------------------------------------------------------------
# Mish math: x * tanh(softplus(x)) rewritten with a single transcendental.
#   s = exp(-|x|)  (always in (0,1], never overflows)
#   x >= 0 : tanh(softplus(x)) = (1 + 2s) / (1 + 2s + 2s^2)
#   x <  0 : tanh(softplus(x)) = (s^2 + 2s) / (s^2 + 2s + 2)
# ----------------------------------------------------------------------------
def _mish_math(x_f32, *, approx=False):
    s = jnp.exp(-jnp.abs(x_f32))
    pos = x_f32 >= 0.0
    num = jnp.where(pos, 1.0 + 2.0 * s, s * (s + 2.0))
    den = num + jnp.where(pos, 2.0 * s * s, 2.0)
    return x_f32 * (num * pl.reciprocal(den, approx=approx))


# ----------------------------------------------------------------------------
# Standalone elementwise Mish kernel (memory-bound, lane-dense blocks).
# ----------------------------------------------------------------------------
def _make_mish_kernel(approx):
    def kernel(x_ref, o_ref):
        x = x_ref[...].astype(jnp.float32)
        o_ref[...] = _mish_math(x, approx=approx).astype(o_ref.dtype)
    return kernel


def _mish_flat(flat, *, target_block_bytes=4 * 1024 * 1024, donate=False):
    """Mish on a flat array whose length is a multiple of 128."""
    n = flat.shape[0]
    dtype = flat.dtype
    itemsize = jnp.dtype(dtype).itemsize
    approx = jnp.dtype(dtype) == jnp.dtype(jnp.bfloat16)

    # Widest lane-dense slab width dividing n -> wide unmasked vst.
    C = 128
    for cand in (4096, 2048, 1024, 512, 256):
        if n % cand == 0:
            C = cand
            break
    R = n // C
    x2d = flat.reshape(R, C)  # free contiguous reshape

    # ~4 MiB blocks; in+out double-buffered = 16 MiB, fits the 32 MiB scoped
    # limit on every generation (incl. v7x's 64 MiB total VMEM per TC).
    align = max(8, 32 // itemsize)  # 8 rows f32, 16 bf16, 32 int8
    tr = max(1, target_block_bytes // (C * itemsize))
    tr = max(align, (tr // align) * align)
    tr = min(tr, R)  # full-dim block when the whole slab is small
    grid = (pl.cdiv(R, tr),)  # partial edge block is masked by Pallas

    kwargs = {}
    if donate:
        kwargs["input_output_aliases"] = {0: 0}

    out2d = pl.pallas_call(
        _make_mish_kernel(approx),
        out_shape=jax.ShapeDtypeStruct((R, C), dtype),
        grid_spec=pltpu.PrefetchScalarGridSpec(
            num_scalar_prefetch=0,
            grid=grid,
            in_specs=[pl.BlockSpec((tr, C), lambda i: (i, 0))],
            out_specs=pl.BlockSpec((tr, C), lambda i: (i, 0)),
        ),
        compiler_params=pltpu.CompilerParams(
            dimension_semantics=("parallel",),
            vmem_limit_bytes=32 * 1024 * 1024,
        ),
        **kwargs,
    )(x2d)
    return out2d.reshape(-1)


def _mish_jnp(x):
    """Plain-jnp Mish (used for tiny tails and as a fusable fallback)."""
    xf = x.astype(jnp.float32)
    sp = jnp.maximum(xf, 0.0) + jnp.log1p(jnp.exp(-jnp.abs(xf)))
    return (xf * jnp.tanh(sp)).astype(x.dtype)


def mish(x, *, donate=False):
    """Applies Mish elementwise. Accepts any shape (e.g. NCHW)."""
    if x.size == 0:
        return x
    orig_shape = x.shape
    n = x.size
    flat = x.reshape(-1)

    if n % 128 == 0:
        # Fast path: no padding copy, no tail-slice copy.
        return _mish_flat(flat, donate=donate).reshape(orig_shape)

    # Ragged fallback: kernel on the 128-aligned prefix, jnp on the <128 tail.
    n_main = (n // 128) * 128
    if n_main == 0:
        return _mish_jnp(flat).reshape(orig_shape)
    head = _mish_flat(flat[:n_main])
    tail = _mish_jnp(flat[n_main:])
    return jnp.concatenate([head, tail]).reshape(orig_shape)


# ----------------------------------------------------------------------------
# Fused conv -> BatchNorm -> Mish: matmul with epilogue on the MXU accumulator.
# ----------------------------------------------------------------------------
def _matmul_bn_mish_kernel(a_ref, b_ref, s_ref, c_ref, o_ref):
    acc = jnp.dot(a_ref[...], b_ref[...], preferred_element_type=jnp.float32)
    z = acc * s_ref[...] + c_ref[...]          # folded BatchNorm (scale, bias)
    o_ref[...] = _mish_math(z).astype(o_ref.dtype)  # Mish while still in VMEM


def conv_bn_mish(x, w, gamma, beta, mean, var, *, stride=1, pad=None, eps=1e-5):
    """NCHW conv (bias-free) + BatchNorm + Mish, fused into one Pallas matmul.

    x: (N, Cin, H, W)   w: (Cout, Cin, kh, kw)   gamma/beta/mean/var: (Cout,)
    """
    N, Cin, H, W = x.shape
    Cout, Cin_w, kh, kw = w.shape
    assert Cin == Cin_w
    if pad is None:
        pad = (kh - 1) // 2

    # im2col (NHWC): K index = (ky*kw + kx)*Cin + c
    x_nhwc = jnp.transpose(x, (0, 2, 3, 1))
    xp = jnp.pad(x_nhwc, ((0, 0), (pad, pad), (pad, pad), (0, 0)))
    Ho = (H + 2 * pad - kh) // stride + 1
    Wo = (W + 2 * pad - kw) // stride + 1
    cols = []
    for i in range(kh):
        for j in range(kw):
            cols.append(xp[:, i:i + stride * Ho:stride, j:j + stride * Wo:stride, :])
    a = cols[0] if len(cols) == 1 else jnp.concatenate(cols, axis=-1)
    M, K = N * Ho * Wo, kh * kw * Cin
    a = a.reshape(M, K)

    # Weight matrix in matching K order; BN folded into per-channel scale/bias.
    b = jnp.transpose(w, (2, 3, 1, 0)).reshape(K, Cout)
    inv_std = gamma / jnp.sqrt(var + eps)
    scale = inv_std.astype(jnp.float32).reshape(1, Cout)
    bias = (beta - mean * inv_std).astype(jnp.float32).reshape(1, Cout)

    tm = M if M <= 512 else 256          # full-dim block for small M, else 256
    grid = (pl.cdiv(M, tm),)

    out = pl.pallas_call(
        _matmul_bn_mish_kernel,
        out_shape=jax.ShapeDtypeStruct((M, Cout), x.dtype),
        grid_spec=pltpu.PrefetchScalarGridSpec(
            num_scalar_prefetch=0,
            grid=grid,
            in_specs=[pl.BlockSpec((tm, K), lambda i: (i, 0)),
                      pl.BlockSpec((K, Cout), lambda i: (0, 0)),
                      pl.BlockSpec((1, Cout), lambda i: (0, 0)),
                      pl.BlockSpec((1, Cout), lambda i: (0, 0))],
            out_specs=pl.BlockSpec((tm, Cout), lambda i: (i, 0)),
        ),
        compiler_params=pltpu.CompilerParams(
            dimension_semantics=("parallel",),
            vmem_limit_bytes=32 * 1024 * 1024,
        ),
    )(a, b, scale, bias)

    out = out.reshape(N, Ho, Wo, Cout)
    return jnp.transpose(out, (0, 3, 1, 2))


# ----------------------------------------------------------------------------
# References
# ----------------------------------------------------------------------------
def _mish_ref(x):
    xf = x.astype(jnp.float32)
    sp = jnp.maximum(xf, 0.0) + jnp.log1p(jnp.exp(-jnp.abs(xf)))
    return (xf * jnp.tanh(sp)).astype(x.dtype)


def _conv_bn_mish_ref(x, w, gamma, beta, mean, var, stride, pad, eps=1e-5):
    y = jax.lax.conv_general_dilated(
        x, w, (stride, stride), [(pad, pad), (pad, pad)],
        dimension_numbers=("NCHW", "OIHW", "NCHW"),
        precision=jax.lax.Precision.HIGHEST)
    inv_std = gamma / jnp.sqrt(var + eps)
    bias = beta - mean * inv_std
    y = y * inv_std[None, :, None, None] + bias[None, :, None, None]
    return _mish_ref(y)


if __name__ == "__main__":
    key = jax.random.PRNGKey(0)
    k1, k2, k3, k4, k5, k6, k7 = jax.random.split(key, 7)

    # 1) Standalone Mish on a conv-style NCHW activation (fast path).
    x = jax.random.normal(k1, (2, 4, 16, 16), dtype=jnp.float32) * 3.0
    y = mish(x)
    jax.block_until_ready(y)
    assert y.shape == x.shape and y.dtype == x.dtype
    assert jnp.allclose(y, _mish_ref(x), atol=1e-5, rtol=1e-5)

    # 2) Ragged fallback (numel % 128 != 0): prefix kernel + jnp tail.
    x2 = jax.random.normal(k2, (3, 5, 7, 11), dtype=jnp.float32) * 3.0
    y2 = mish(x2)
    jax.block_until_ready(y2)
    assert y2.shape == x2.shape and y2.dtype == x2.dtype
    assert jnp.allclose(y2, _mish_ref(x2), atol=1e-5, rtol=1e-5)

    # 3) Fused 3x3 conv + BN + Mish (the standard Darknet conv block).
    cin, cout = 4, 8
    xin = jax.random.normal(k1, (2, cin, 16, 16), dtype=jnp.float32)
    w3 = jax.random.normal(k3, (cout, cin, 3, 3), dtype=jnp.float32) * 0.1
    gamma = 1.0 + 0.1 * jax.random.normal(k4, (cout,), dtype=jnp.float32)
    beta = 0.1 * jax.random.normal(k5, (cout,), dtype=jnp.float32)
    mean = 0.1 * jax.random.normal(k6, (cout,), dtype=jnp.float32)
    var = jnp.abs(1.0 + 0.1 * jax.random.normal(k7, (cout,), dtype=jnp.float32))
    y3 = conv_bn_mish(xin, w3, gamma, beta, mean, var, stride=1, pad=1)
    jax.block_until_ready(y3)
    y3_ref = _conv_bn_mish_ref(xin, w3, gamma, beta, mean, var, 1, 1)
    assert y3.shape == y3_ref.shape
    assert jnp.allclose(y3, y3_ref, atol=5e-3, rtol=5e-3)

    # 4) Fused 1x1 conv + BN + Mish, stride 2 (the other common Darknet conv).
    w1 = jax.random.normal(k3, (cout, cin, 1, 1), dtype=jnp.float32) * 0.3
    y4 = conv_bn_mish(xin, w1, gamma, beta, mean, var, stride=2, pad=0)
    jax.block_until_ready(y4)
    y4_ref = _conv_bn_mish_ref(xin, w1, gamma, beta, mean, var, 2, 0)
    assert y4.shape == y4_ref.shape
    assert jnp.allclose(y4, y4_ref, atol=5e-3, rtol=5e-3)

    print("KERNEL_OK")
</pallas_src>

<mosaic_0001>
module attributes {stable_mosaic.version = 11 : i64} {
  func.func @kernel(%arg0: i32, %arg1: memref<1x2048xf32, #tpu.memory_space<vmem>>, %arg2: memref<1x2048xf32, #tpu.memory_space<vmem>>) attributes {dimension_semantics = [#tpu.dimension_semantics<parallel>], iteration_bounds = array<i64: 1>, scalar_prefetch = 0 : i64, scratch_operands = 0 : i64, tpu.core_type = #tpu.core_type<tc>, window_params = [{transform_indices = @transform_0, window_bounds = array<i64: 1, 2048>}, {transform_indices = @transform_1, window_bounds = array<i64: 1, 2048>}]} {
    %c0 = arith.constant 0 : index
    %c0_0 = arith.constant 0 : index
    %0 = vector.load %arg1[%c0, %c0_0] : memref<1x2048xf32, #tpu.memory_space<vmem>>, vector<1x2048xf32>
    %1 = math.absf %0 : vector<1x2048xf32>
    %cst = arith.constant 0.000000e+00 : f32
    %2 = vector.broadcast %cst : f32 to vector<1x2048xf32>
    %3 = arith.subf %2, %1 : vector<1x2048xf32>
    %4 = math.exp %3 : vector<1x2048xf32>
    %cst_1 = arith.constant 0.000000e+00 : f32
    %5 = vector.broadcast %cst_1 : f32 to vector<1x2048xf32>
    %6 = arith.cmpf oge, %0, %5 : vector<1x2048xf32>
    %cst_2 = arith.constant 2.000000e+00 : f32
    %7 = vector.broadcast %cst_2 : f32 to vector<1x2048xf32>
    %8 = arith.mulf %7, %4 : vector<1x2048xf32>
    %cst_3 = arith.constant 1.000000e+00 : f32
    %9 = vector.broadcast %cst_3 : f32 to vector<1x2048xf32>
    %10 = arith.addf %9, %8 : vector<1x2048xf32>
    %cst_4 = arith.constant 2.000000e+00 : f32
    %11 = vector.broadcast %cst_4 : f32 to vector<1x2048xf32>
    %12 = arith.addf %4, %11 : vector<1x2048xf32>
    %13 = arith.mulf %4, %12 : vector<1x2048xf32>
    %14 = arith.select %6, %10, %13 : vector<1x2048xi1>, vector<1x2048xf32>
    %cst_5 = arith.constant 2.000000e+00 : f32
    %15 = vector.broadcast %cst_5 : f32 to vector<1x2048xf32>
    %16 = arith.mulf %15, %4 : vector<1x2048xf32>
    %17 = arith.mulf %16, %4 : vector<1x2048xf32>
    %cst_6 = arith.constant 2.000000e+00 : f32
    %18 = vector.broadcast %cst_6 : f32 to vector<1x2048xf32>
    %19 = arith.select %6, %17, %18 : vector<1x2048xi1>, vector<1x2048xf32>
    %20 = arith.addf %14, %19 : vector<1x2048xf32>
    %21 = tpu.reciprocal %20 : vector<1x2048xf32> -> vector<1x2048xf32>
    %22 = arith.mulf %14, %21 : vector<1x2048xf32>
    %23 = arith.mulf %0, %22 : vector<1x2048xf32>
    %c0_7 = arith.constant 0 : index
    %c0_8 = arith.constant 0 : index
    %24 = vector.load %arg2[%c0_7, %c0_8] : memref<1x2048xf32, #tpu.memory_space<vmem>>, vector<1x2048xf32>
    tpu.vector_store %arg2[%c0_7, %c0_8], %23 {strides = array<i32>} : memref<1x2048xf32, #tpu.memory_space<vmem>>, vector<1x2048xf32>,
    return
  }
  func.func @transform_0(%arg0: i32) -> (i32, i32) {
    %c0_i32 = arith.constant 0 : i32
    %c0_i32_0 = arith.constant 0 : i32
    return %arg0, %c0_i32 : i32, i32
  }
  func.func @transform_1(%arg0: i32) -> (i32, i32) {
    %c0_i32 = arith.constant 0 : i32
    %c0_i32_0 = arith.constant 0 : i32
    return %arg0, %c0_i32 : i32, i32
  }
}

</mosaic_0001>

<llo_original>
// kernel: tpu_custom_call.1
$region0: #{tpu_custom_call.1}
  #allocation0 [shape = 'u32[]', space=smem, size = 0x4, offset = 0x4, fixed_abs, tag = 'smem constant byte address 0x4 - core index']
  #allocation1 [shape = 'u32[144,128]{1,0:T(1,128)}', space=vmem, size = 0x12000, scoped, tag = 'internal scratch']
  %s0 = inlined_call_operand.hbm [shape: f32[1,2048], index: 0, kind: input, shape index: {}]
  %s1 = inlined_call_operand.hbm [shape: f32[1,2048], index: 1, kind: output, shape index: {}]
  %s2 = sld [smem:[#allocation0]]
  $region18: #{tpu_custom_call.1} parent=0
    _
  %s4 = ssub.s32 1, %s2
  %s5 = scalar_select 0, %s4, %s2
  $region1: #{tpu_custom_call.1} parent=0
    #allocation2 [shape = 'u8[8192]{0}', space=vmem, size = 0x2000, scoped, tag = 'input window, operand 0, single buffered']
    #allocation3 [shape = 's32[1]{0}', space=sflag, size = 0x4, scoped, tag = 'scoped memory for tpu_custom_call.1']
    #allocation4 [shape = 's32[1]{0}', space=sflag, size = 0x4, scoped, tag = 'scoped memory for tpu_custom_call.1']
    #allocation5 [shape = 'u8[8192]{0}', space=vmem, size = 0x2000, scoped, tag = 'output window, operand 0, single buffered']
    %6 = vsyncpa [#allocation3], 0
    %7 = vsyncpa [#allocation4], 0
    // Predicated region
    $region2: #{tpu_custom_call.1} parent=1 // pred_check
      _
    $region3: #{tpu_custom_call.1} parent=1 // pred_check_branch
      %9 = sbr.rel (0) target = $region5
    $region4: #{tpu_custom_call.1} parent=1 // pred_region
      %s11 = ssub.s32 256, 256
      %12 = vsyncadd [#allocation3], %s11
      %s14 = sshll.u32 [#allocation2], 4
      %s15 = int_to_ptr.vmem [resolvable:$true] %s14
      %17 = dma.hbm_to_vmem [thread:$0]  %s0, 256, %s15, [#allocation3]
    $region5: #{tpu_custom_call.1} parent=1 // pred_fallthru
      _
    // Predicated region
    $region6: #{tpu_custom_call.1} parent=1 // pred_check
      _
    $region7: #{tpu_custom_call.1} parent=1 // pred_check_branch
      %19 = sbr.rel (0) target = $region9
    $region8: #{tpu_custom_call.1} parent=1 // pred_region
      %20 = dma.done [#allocation3], 256
    $region9: #{tpu_custom_call.1} parent=1 // pred_fallthru
      _
    %v21 = vld [vmem:[#allocation2] sm:$0xff]
    %v22 = vld [vmem:[#allocation2 + $0x8] sm:$0xff]
    %v23 = vand.u32 2147483647, %v21
    %v24 = vand.u32 2147483647, %v22
    %v25 = vsub.f32 0.0, %v23
    %v26 = vsub.f32 0.0, %v24
    %v27 = vmul.f32 %v25, 1.442695
    %v28 = vpow.pop %v27
    %v29 = vmul.f32 %v26, 1.442695
    %v30 = vpow.pop %v29
    %vm31 = vcmp.ge.f32.partialorder %v21, 0.0
    %vm32 = vcmp.ge.f32.partialorder %v22, 0.0
    %v33 = vmul.f32 %v28, 2.0
    %v34 = vmul.f32 %v30, 2.0
    %v35 = vadd.f32 %v33, 1.0
    %v36 = vadd.f32 %v34, 1.0
    %v37 = vadd.f32 %v28, 2.0
    %v38 = vadd.f32 %v30, 2.0
    %v39 = vmul.f32 %v28, %v37
    %v40 = vmul.f32 %v30, %v38
    %v41 = vsel %vm31, %v35, %v39
    %v42 = vsel %vm32, %v36, %v40
    %v43 = vmul.f32 %v33, %v28
    %v44 = vmul.f32 %v34, %v30
    %v45 = vsel %vm31, %v43, 2.0
    %v46 = vsel %vm32, %v44, 2.0
    %v47 = vadd.f32 %v41, %v45
    %v48 = vadd.f32 %v42, %v46
    %v49 = vrcp.pop %v47
    %v50 = vrcp.pop %v48
    %v51 = vmul.f32 %v41, %v49
    %v52 = vmul.f32 %v42, %v50
    %v53 = vmul.f32 %v21, %v51
    %v54 = vmul.f32 %v22, %v52
    %55 = vst [vmem:[#allocation5] sm:$0xff] %v53
    %56 = vst [vmem:[#allocation5 + $0x8] sm:$0xff] %v54
    // Predicated region
    $region10: #{tpu_custom_call.1} parent=1 // pred_check
      _
    $region11: #{tpu_custom_call.1} parent=1 // pred_check_branch
      %58 = sbr.rel (0) target = $region13
    $region12: #{tpu_custom_call.1} parent=1 // pred_region
      %s60 = ssub.s32 256, 256
      %61 = vsyncadd [#allocation4], %s60
      %s63 = sshll.u32 [#allocation5], 4
      %s64 = int_to_ptr.vmem [resolvable:$true] %s63
      %66 = dma.vmem_to_hbm [thread:$0]  %s64, 256, %s1, [#allocation4]
    $region13: #{tpu_custom_call.1} parent=1 // pred_fallthru
      _
    // Predicated region
    $region14: #{tpu_custom_call.1} parent=1 // pred_check
      _
    $region15: #{tpu_custom_call.1} parent=1 // pred_check_branch
      %68 = sbr.rel (0) target = $region17
    $region16: #{tpu_custom_call.1} parent=1 // pred_region
      %69 = dma.done [#allocation4], 256
    $region17: #{tpu_custom_call.1} parent=1 // pred_fallthru
      _
    %70 = vsyncpa [#allocation3], 1
    %71 = vsyncpa [#allocation4], 1

</llo_original>
